<compile_context>
chip_gen: v7x
topology: tpu7x:2x2x1
jax: 0.10.0
libtpu: 0.0.40
codegen_flags: <defaults>
</compile_context>

<pallas_src>
import functools
import math

import numpy as np

import jax
import jax.numpy as jnp
from jax.experimental import pallas as pl
from jax.experimental.pallas import tpu as pltpu

_LANE = 128          # minimum lane granularity
_T_TILE_MAX = 2048   # max lanes per grid step (64 KiB f32 output block at n_pad=8)


def _round_up(x, m):
    return ((x + m - 1) // m) * m


def _make_bezier_kernel(num_bends, n_pad):
    """Kernel producing out[k, j] = binom(n-1,k) * t_j^k * (1-t_j)^(n-1-k)."""
    binom_vals = tuple(float(math.comb(num_bends - 1, j)) for j in range(num_bends))
    nbits = max(1, (num_bends - 1).bit_length())

    def kernel(t_ref, out_ref):
        t = t_ref[...]                   # (1, T_tile), broadcasts over sublanes
        u = 1.0 - t

        # Bend index per output row (int32; no float-equality compares).
        k = jax.lax.broadcasted_iota(jnp.int32, out_ref.shape, 0)   # (n_pad, T_tile)
        rk = jnp.int32(num_bends - 1) - k                           # reversed exponent

        # Binomial coefficients built in-kernel on an (n_pad, 1) column (no DMA).
        # Padded rows (k >= num_bends) stay exactly 0, zeroing the whole row.
        k_col = jax.lax.broadcasted_iota(jnp.int32, (n_pad, 1), 0)
        binom = jnp.zeros((n_pad, 1), jnp.float32)
        for j, c in enumerate(binom_vals):
            binom = jnp.where(k_col == j, jnp.float32(c), binom)

        # Square-and-multiply: t^k and (1-t)^(n-1-k) via bit selects (pure VPU,
        # no EUP).  0^0 = 1 falls out naturally (all-bits-clear -> product of 1s).
        tk = None
        uk = None
        tb, ub = t, u
        for b in range(nbits):
            bit = 1 << b
            sel_t = jnp.where((k & bit) != 0, tb, jnp.float32(1.0))
            sel_u = jnp.where((rk & bit) != 0, ub, jnp.float32(1.0))
            tk = sel_t if tk is None else tk * sel_t
            uk = sel_u if uk is None else uk * sel_u
            if b + 1 < nbits:
                tb = tb * tb
                ub = ub * ub

        out_ref[...] = binom * tk * uk   # (n_pad, 1) lane-broadcast into the tile

    return kernel


@functools.lru_cache(maxsize=None)
def _compiled_bezier(num_bends, t_total):
    """Cached jitted (pad + pallas_call) for a given (num_bends, batch size)."""
    n_pad = _round_up(num_bends, 8)
    t_tile = min(_T_TILE_MAX, _round_up(max(t_total, 1), _LANE))
    t_pad = _round_up(max(t_total, 1), t_tile)
    grid = (t_pad // t_tile,)

    kernel = _make_bezier_kernel(num_bends, n_pad)
    call = pl.pallas_call(
        kernel,
        out_shape=jax.ShapeDtypeStruct((n_pad, t_pad), jnp.float32),
        grid_spec=pltpu.PrefetchScalarGridSpec(
            num_scalar_prefetch=0,
            grid=grid,
            in_specs=[pl.BlockSpec((1, t_tile), lambda i: (0, i))],
            out_specs=pl.BlockSpec((n_pad, t_tile), lambda i: (0, i)),
        ),
        compiler_params=pltpu.CompilerParams(
            dimension_semantics=("parallel",)),   # shards grid steps across v7x's 2 TCs
    )

    def run(t_flat):
        t2 = jnp.zeros((1, t_pad), jnp.float32).at[0, :t_total].set(t_flat)
        return call(t2)

    return jax.jit(run)


def bezier_coeffs_lane_major(t_batch, num_bends):
    """Lane-major Bezier coefficients (the Pallas primitive).

    t_batch: (T,) curve parameters.  Returns (N_pad, T_pad) float32 where
    N_pad = round_up(num_bends, 8), T_pad = padded batch.  Rows >= num_bends
    are exactly 0; columns >= T correspond to padding (t = 0) and should be
    ignored by the consumer.  Consuming this layout directly (e.g. via
    einsum('kt,k...->t...')) avoids an extra HBM pass for transpose/slice.
    """
    t_batch = jnp.asarray(t_batch, jnp.float32).reshape(-1)
    return _compiled_bezier(int(num_bends), int(t_batch.shape[0]))(t_batch)


def bezier_batch(t_batch, num_bends):
    """Convenience: (T, num_bends) coefficients.

    NOTE: the transpose+slice below is an extra XLA pass over the result;
    performance-critical consumers should use bezier_coeffs_lane_major.
    """
    t_batch = jnp.asarray(t_batch, jnp.float32).reshape(-1)
    out = bezier_coeffs_lane_major(t_batch, num_bends)
    return out[:num_bends, :t_batch.shape[0]].T


def bezier_forward(t, num_bends, use_pallas=False):
    """Matches Bezier.forward: scalar t -> (num_bends,) Bernstein coefficients.

    Default is a plain-XLA fast path: a Pallas launch for num_bends floats is
    pure fixed overhead and XLA fuses this tiny expression for free.
    """
    if use_pallas:
        t_vec = jnp.reshape(jnp.asarray(t, jnp.float32), (1,))
        return bezier_coeffs_lane_major(t_vec, num_bends)[:num_bends, 0]
    n = int(num_bends)
    t = jnp.asarray(t, jnp.float32)
    binom = jnp.asarray([math.comb(n - 1, j) for j in range(n)], jnp.float32)
    rng = jnp.arange(n, dtype=jnp.float32)
    rev = jnp.arange(n - 1, -1, -1, dtype=jnp.float32)
    return binom * jnp.power(t, rng) * jnp.power(1.0 - t, rev)


if __name__ == "__main__":
    key = jax.random.PRNGKey(0)
    k1, k2, k3 = jax.random.split(key, 3)

    def ref_np(ts, n):
        """float64 numpy reference of the PyTorch forward, vectorized over t."""
        ts = np.atleast_1d(np.asarray(ts, np.float64))[:, None]
        binom = np.asarray([math.comb(n - 1, j) for j in range(n)], np.float64)
        rng = np.arange(n, dtype=np.float64)
        rev = np.arange(n - 1, -1, -1, dtype=np.float64)
        return binom * np.power(ts, rng) * np.power(1.0 - ts, rev)

    # --- Scalar module contract (both the XLA fast path and the Pallas path) ---
    num_bends = 8
    t_scalar = jax.random.uniform(k1, (), jnp.float32, minval=0.05, maxval=0.95)
    c_fast = jax.block_until_ready(bezier_forward(t_scalar, num_bends))
    c_pallas = jax.block_until_ready(bezier_forward(t_scalar, num_bends, use_pallas=True))
    assert c_fast.shape == (num_bends,) and c_pallas.shape == (num_bends,)
    ref_scalar = ref_np(float(t_scalar), num_bends)[0]
    np.testing.assert_allclose(np.asarray(c_fast), ref_scalar, rtol=1e-5, atol=1e-6)
    np.testing.assert_allclose(np.asarray(c_pallas), ref_scalar, rtol=1e-5, atol=1e-6)

    # --- Batched Pallas path, num_bends multiple of 8, multiple grid steps ---
    # T = 2560 -> t_tile = 2048, t_pad = 4096, grid = (2,): exercises pipelining
    # and lets both v7x TensorCores take a step.  Includes both endpoints.
    t_batch = jnp.concatenate([
        jnp.asarray([0.0, 1.0], jnp.float32),
        jax.random.uniform(k2, (2558,), jnp.float32),
    ])
    coeffs = jax.block_until_ready(bezier_batch(t_batch, num_bends))
    assert coeffs.shape == (t_batch.shape[0], num_bends)
    np.testing.assert_allclose(
        np.asarray(coeffs), ref_np(np.asarray(t_batch), num_bends),
        rtol=1e-5, atol=1e-6)
    # Bernstein partition of unity: coefficients sum to 1 for every t.
    np.testing.assert_allclose(np.asarray(coeffs).sum(-1), 1.0, rtol=1e-5)

    # --- num_bends not a multiple of 8 (exercises sublane padding) ---
    num_bends2 = 5
    t_small = jax.random.uniform(k3, (37,), jnp.float32)
    lane_major = jax.block_until_ready(bezier_coeffs_lane_major(t_small, num_bends2))
    assert lane_major.shape[0] % 8 == 0 and lane_major.shape[1] % 128 == 0
    # Padded bend rows are exactly zero.
    np.testing.assert_array_equal(np.asarray(lane_major[num_bends2:]), 0.0)
    np.testing.assert_allclose(
        np.asarray(lane_major[:num_bends2, :t_small.shape[0]]).T,
        ref_np(np.asarray(t_small), num_bends2),
        rtol=1e-5, atol=1e-6)

    print("KERNEL_OK")
</pallas_src>

<mosaic_0001>
module attributes {stable_mosaic.version = 11 : i64} {
  func.func @kernel(%arg0: i32, %arg1: memref<1x128xf32, #tpu.memory_space<vmem>>, %arg2: memref<8x128xf32, #tpu.memory_space<vmem>>) attributes {dimension_semantics = [#tpu.dimension_semantics<parallel>], iteration_bounds = array<i64: 1>, scalar_prefetch = 0 : i64, scratch_operands = 0 : i64, tpu.core_type = #tpu.core_type<tc>, window_params = [{transform_indices = @transform_0, window_bounds = array<i64: 1, 128>}, {transform_indices = @transform_1, window_bounds = array<i64: 8, 128>}]} {
    %c0 = arith.constant 0 : index
    %c0_0 = arith.constant 0 : index
    %0 = vector.load %arg1[%c0, %c0_0] : memref<1x128xf32, #tpu.memory_space<vmem>>, vector<1x128xf32>
    %cst = arith.constant 1.000000e+00 : f32
    %1 = vector.broadcast %cst : f32 to vector<1x128xf32>
    %2 = arith.subf %1, %0 : vector<1x128xf32>
    %3 = tpu.iota {dimensions = array<i32: 0>} : vector<8x128xi32>
    %c7_i32 = arith.constant 7 : i32
    %4 = vector.broadcast %c7_i32 : i32 to vector<8x128xi32>
    %5 = arith.subi %4, %3 : vector<8x128xi32>
    %6 = tpu.iota {dimensions = array<i32: 0>} : vector<8x1xi32>
    %cst_1 = arith.constant 0.000000e+00 : f32
    %7 = vector.broadcast %cst_1 : f32 to vector<8x1xf32>
    %c0_i32 = arith.constant 0 : i32
    %8 = vector.broadcast %c0_i32 : i32 to vector<8x1xi32>
    %9 = arith.cmpi eq, %6, %8 : vector<8x1xi32>
    %cst_2 = arith.constant 1.000000e+00 : f32
    %10 = vector.broadcast %cst_2 : f32 to vector<8x1xf32>
    %11 = arith.select %9, %10, %7 : vector<8x1xi1>, vector<8x1xf32>
    %c1_i32 = arith.constant 1 : i32
    %12 = vector.broadcast %c1_i32 : i32 to vector<8x1xi32>
    %13 = arith.cmpi eq, %6, %12 : vector<8x1xi32>
    %cst_3 = arith.constant 7.000000e+00 : f32
    %14 = vector.broadcast %cst_3 : f32 to vector<8x1xf32>
    %15 = arith.select %13, %14, %11 : vector<8x1xi1>, vector<8x1xf32>
    %c2_i32 = arith.constant 2 : i32
    %16 = vector.broadcast %c2_i32 : i32 to vector<8x1xi32>
    %17 = arith.cmpi eq, %6, %16 : vector<8x1xi32>
    %cst_4 = arith.constant 2.100000e+01 : f32
    %18 = vector.broadcast %cst_4 : f32 to vector<8x1xf32>
    %19 = arith.select %17, %18, %15 : vector<8x1xi1>, vector<8x1xf32>
    %c3_i32 = arith.constant 3 : i32
    %20 = vector.broadcast %c3_i32 : i32 to vector<8x1xi32>
    %21 = arith.cmpi eq, %6, %20 : vector<8x1xi32>
    %cst_5 = arith.constant 3.500000e+01 : f32
    %22 = vector.broadcast %cst_5 : f32 to vector<8x1xf32>
    %23 = arith.select %21, %22, %19 : vector<8x1xi1>, vector<8x1xf32>
    %c4_i32 = arith.constant 4 : i32
    %24 = vector.broadcast %c4_i32 : i32 to vector<8x1xi32>
    %25 = arith.cmpi eq, %6, %24 : vector<8x1xi32>
    %cst_6 = arith.constant 3.500000e+01 : f32
    %26 = vector.broadcast %cst_6 : f32 to vector<8x1xf32>
    %27 = arith.select %25, %26, %23 : vector<8x1xi1>, vector<8x1xf32>
    %c5_i32 = arith.constant 5 : i32
    %28 = vector.broadcast %c5_i32 : i32 to vector<8x1xi32>
    %29 = arith.cmpi eq, %6, %28 : vector<8x1xi32>
    %cst_7 = arith.constant 2.100000e+01 : f32
    %30 = vector.broadcast %cst_7 : f32 to vector<8x1xf32>
    %31 = arith.select %29, %30, %27 : vector<8x1xi1>, vector<8x1xf32>
    %c6_i32 = arith.constant 6 : i32
    %32 = vector.broadcast %c6_i32 : i32 to vector<8x1xi32>
    %33 = arith.cmpi eq, %6, %32 : vector<8x1xi32>
    %cst_8 = arith.constant 7.000000e+00 : f32
    %34 = vector.broadcast %cst_8 : f32 to vector<8x1xf32>
    %35 = arith.select %33, %34, %31 : vector<8x1xi1>, vector<8x1xf32>
    %c7_i32_9 = arith.constant 7 : i32
    %36 = vector.broadcast %c7_i32_9 : i32 to vector<8x1xi32>
    %37 = arith.cmpi eq, %6, %36 : vector<8x1xi32>
    %cst_10 = arith.constant 1.000000e+00 : f32
    %38 = vector.broadcast %cst_10 : f32 to vector<8x1xf32>
    %39 = arith.select %37, %38, %35 : vector<8x1xi1>, vector<8x1xf32>
    %c1_i32_11 = arith.constant 1 : i32
    %40 = vector.broadcast %c1_i32_11 : i32 to vector<8x128xi32>
    %41 = arith.andi %3, %40 : vector<8x128xi32>
    %c0_i32_12 = arith.constant 0 : i32
    %42 = vector.broadcast %c0_i32_12 : i32 to vector<8x128xi32>
    %43 = arith.cmpi ne, %41, %42 : vector<8x128xi32>
    %cst_13 = arith.constant 1.000000e+00 : f32
    %44 = vector.shape_cast %0 : vector<1x128xf32> to vector<1x128xf32>
    %45 = vector.broadcast %44 : vector<1x128xf32> to vector<8x128xf32>
    %46 = vector.broadcast %cst_13 : f32 to vector<8x128xf32>
    %47 = arith.select %43, %45, %46 : vector<8x128xi1>, vector<8x128xf32>
    %c1_i32_14 = arith.constant 1 : i32
    %48 = vector.broadcast %c1_i32_14 : i32 to vector<8x128xi32>
    %49 = arith.andi %5, %48 : vector<8x128xi32>
    %c0_i32_15 = arith.constant 0 : i32
    %50 = vector.broadcast %c0_i32_15 : i32 to vector<8x128xi32>
    %51 = arith.cmpi ne, %49, %50 : vector<8x128xi32>
    %cst_16 = arith.constant 1.000000e+00 : f32
    %52 = vector.shape_cast %2 : vector<1x128xf32> to vector<1x128xf32>
    %53 = vector.broadcast %52 : vector<1x128xf32> to vector<8x128xf32>
    %54 = vector.broadcast %cst_16 : f32 to vector<8x128xf32>
    %55 = arith.select %51, %53, %54 : vector<8x128xi1>, vector<8x128xf32>
    %56 = arith.mulf %0, %0 : vector<1x128xf32>
    %57 = arith.mulf %2, %2 : vector<1x128xf32>
    %c2_i32_17 = arith.constant 2 : i32
    %58 = vector.broadcast %c2_i32_17 : i32 to vector<8x128xi32>
    %59 = arith.andi %3, %58 : vector<8x128xi32>
    %c0_i32_18 = arith.constant 0 : i32
    %60 = vector.broadcast %c0_i32_18 : i32 to vector<8x128xi32>
    %61 = arith.cmpi ne, %59, %60 : vector<8x128xi32>
    %cst_19 = arith.constant 1.000000e+00 : f32
    %62 = vector.shape_cast %56 : vector<1x128xf32> to vector<1x128xf32>
    %63 = vector.broadcast %62 : vector<1x128xf32> to vector<8x128xf32>
    %64 = vector.broadcast %cst_19 : f32 to vector<8x128xf32>
    %65 = arith.select %61, %63, %64 : vector<8x128xi1>, vector<8x128xf32>
    %c2_i32_20 = arith.constant 2 : i32
    %66 = vector.broadcast %c2_i32_20 : i32 to vector<8x128xi32>
    %67 = arith.andi %5, %66 : vector<8x128xi32>
    %c0_i32_21 = arith.constant 0 : i32
    %68 = vector.broadcast %c0_i32_21 : i32 to vector<8x128xi32>
    %69 = arith.cmpi ne, %67, %68 : vector<8x128xi32>
    %cst_22 = arith.constant 1.000000e+00 : f32
    %70 = vector.shape_cast %57 : vector<1x128xf32> to vector<1x128xf32>
    %71 = vector.broadcast %70 : vector<1x128xf32> to vector<8x128xf32>
    %72 = vector.broadcast %cst_22 : f32 to vector<8x128xf32>
    %73 = arith.select %69, %71, %72 : vector<8x128xi1>, vector<8x128xf32>
    %74 = arith.mulf %47, %65 : vector<8x128xf32>
    %75 = arith.mulf %55, %73 : vector<8x128xf32>
    %76 = arith.mulf %56, %56 : vector<1x128xf32>
    %77 = arith.mulf %57, %57 : vector<1x128xf32>
    %c4_i32_23 = arith.constant 4 : i32
    %78 = vector.broadcast %c4_i32_23 : i32 to vector<8x128xi32>
    %79 = arith.andi %3, %78 : vector<8x128xi32>
    %c0_i32_24 = arith.constant 0 : i32
    %80 = vector.broadcast %c0_i32_24 : i32 to vector<8x128xi32>
    %81 = arith.cmpi ne, %79, %80 : vector<8x128xi32>
    %cst_25 = arith.constant 1.000000e+00 : f32
    %82 = vector.shape_cast %76 : vector<1x128xf32> to vector<1x128xf32>
    %83 = vector.broadcast %82 : vector<1x128xf32> to vector<8x128xf32>
    %84 = vector.broadcast %cst_25 : f32 to vector<8x128xf32>
    %85 = arith.select %81, %83, %84 : vector<8x128xi1>, vector<8x128xf32>
    %c4_i32_26 = arith.constant 4 : i32
    %86 = vector.broadcast %c4_i32_26 : i32 to vector<8x128xi32>
    %87 = arith.andi %5, %86 : vector<8x128xi32>
    %c0_i32_27 = arith.constant 0 : i32
    %88 = vector.broadcast %c0_i32_27 : i32 to vector<8x128xi32>
    %89 = arith.cmpi ne, %87, %88 : vector<8x128xi32>
    %cst_28 = arith.constant 1.000000e+00 : f32
    %90 = vector.shape_cast %77 : vector<1x128xf32> to vector<1x128xf32>
    %91 = vector.broadcast %90 : vector<1x128xf32> to vector<8x128xf32>
    %92 = vector.broadcast %cst_28 : f32 to vector<8x128xf32>
    %93 = arith.select %89, %91, %92 : vector<8x128xi1>, vector<8x128xf32>
    %94 = arith.mulf %74, %85 : vector<8x128xf32>
    %95 = arith.mulf %75, %93 : vector<8x128xf32>
    %96 = vector.broadcast %39 : vector<8x1xf32> to vector<8x128xf32>
    %97 = arith.mulf %96, %94 : vector<8x128xf32>
    %98 = arith.mulf %97, %95 : vector<8x128xf32>
    %c0_29 = arith.constant 0 : index
    %c0_30 = arith.constant 0 : index
    %99 = vector.load %arg2[%c0_29, %c0_30] : memref<8x128xf32, #tpu.memory_space<vmem>>, vector<8x128xf32>
    tpu.vector_store %arg2[%c0_29, %c0_30], %98 {strides = array<i32>} : memref<8x128xf32, #tpu.memory_space<vmem>>, vector<8x128xf32>,
    return
  }
  func.func @transform_0(%arg0: i32) -> (i32, i32) {
    %c0_i32 = arith.constant 0 : i32
    %c0_i32_0 = arith.constant 0 : i32
    return %c0_i32, %arg0 : i32, i32
  }
  func.func @transform_1(%arg0: i32) -> (i32, i32) {
    %c0_i32 = arith.constant 0 : i32
    %c0_i32_0 = arith.constant 0 : i32
    return %c0_i32, %arg0 : i32, i32
  }
}

</mosaic_0001>

<llo_original>
// kernel: run.1
$region0: #{run.1}
  #allocation0 [shape = 'u32[]', space=smem, size = 0x4, offset = 0x4, fixed_abs, tag = 'smem constant byte address 0x4 - core index']
  #allocation1 [shape = 'u32[144,128]{1,0:T(1,128)}', space=vmem, size = 0x12000, scoped, tag = 'internal scratch']
  %s0 = inlined_call_operand.vmem [shape: f32[1,128], index: 0, kind: input, shape index: {}]
  %s1 = inlined_call_operand.hbm [shape: f32[8,128], index: 1, kind: output, shape index: {}]
  %s2 = sld [smem:[#allocation0]]
  $region14: #{run.1} parent=0
    _
  %s4 = ssub.s32 1, %s2
  %s5 = scalar_select 0, %s4, %s2
  $region1: #{run.1} parent=0
    #allocation2 [shape = 'u8[4096]{0}', space=vmem, size = 0x1000, scoped, tag = 'output window, operand 0, single buffered']
    #allocation3 [shape = 's32[1]{0}', space=sflag, size = 0x4, scoped, tag = 'scoped memory for run.1']
    %6 = vsyncpa [#allocation3], 0
    // Predicated region
    $region2: #{run.1} parent=1 // pred_check
      _
    $region3: #{run.1} parent=1 // pred_check_branch
      %8 = sbr.rel (0) target = $region5
    $region4: #{run.1} parent=1 // pred_region
      _
    $region5: #{run.1} parent=1 // pred_fallthru
      _
    %v9 = vld [vmem:[%s0] sm:$0x1]
    %v10 = vsub.f32 1.0, %v9
    %v11 = vlaneseq
    %v12 = vshrl.u32 %v11, 7
    %v13 = vsub.s32 7, %v12
    %vm14 = vcmp.eq.s32.totalorder %v12, 0
    %v15 = vsel %vm14, 1.0, 0.0
    %vm16 = vcmp.eq.s32.totalorder %v12, 1
    %v17 = vsel %vm16, 7.0, %v15
    %vm18 = vcmp.eq.s32.totalorder %v12, 2
    %v19 = vsel %vm18, 21.0, %v17
    %vm20 = vcmp.eq.s32.totalorder %v12, 3
    %v21 = vsel %vm20, 35.0, %v19
    %vm22 = vcmp.eq.s32.totalorder %v12, 4
    %v23 = vsel %vm22, 35.0, %v21
    %vm24 = vcmp.eq.s32.totalorder %v12, 5
    %v25 = vsel %vm24, 21.0, %v23
    %vm26 = vcmp.eq.s32.totalorder %v12, 6
    %v27 = vsel %vm26, 7.0, %v25
    %vm28 = vcmp.eq.s32.totalorder %v12, 7
    %v29 = vsel %vm28, 1.0, %v27
    %v30 = vand.u32 %v12, 1
    %vm31 = vcmp.ne.s32.totalorder %v30, 0
    %v33 = vlaneseq
    %v34 = vshrl.u32 %v33, 7
    %v35 = vsub.s32 0, %v34
    %v36 = vrot.slane %v9, %v35
    %v38 = vsel %vm31, %v36, 1.0
    %v39 = vand.u32 %v13, 1
    %vm40 = vcmp.ne.s32.totalorder %v39, 0
    %v42 = vlaneseq
    %v43 = vshrl.u32 %v42, 7
    %v44 = vsub.s32 0, %v43
    %v45 = vrot.slane %v10, %v44
    %v47 = vsel %vm40, %v45, 1.0
    %v48 = vmul.f32 %v9, %v9
    %v49 = vmul.f32 %v10, %v10
    %v50 = vand.u32 %v12, 2
    %vm51 = vcmp.ne.s32.totalorder %v50, 0
    %v53 = vlaneseq
    %v54 = vshrl.u32 %v53, 7
    %v55 = vsub.s32 0, %v54
    %v56 = vrot.slane %v48, %v55
    %v58 = vsel %vm51, %v56, 1.0
    %v59 = vand.u32 %v13, 2
    %vm60 = vcmp.ne.s32.totalorder %v59, 0
    %v62 = vlaneseq
    %v63 = vshrl.u32 %v62, 7
    %v64 = vsub.s32 0, %v63
    %v65 = vrot.slane %v49, %v64
    %v67 = vsel %vm60, %v65, 1.0
    %v68 = vmul.f32 %v38, %v58
    %v69 = vmul.f32 %v47, %v67
    %v70 = vmul.f32 %v48, %v48
    %v71 = vmul.f32 %v49, %v49
    %v72 = vand.u32 %v12, 4
    %vm73 = vcmp.ne.s32.totalorder %v72, 0
    %v75 = vlaneseq
    %v76 = vshrl.u32 %v75, 7
    %v77 = vsub.s32 0, %v76
    %v78 = vrot.slane %v70, %v77
    %v80 = vsel %vm73, %v78, 1.0
    %v81 = vand.u32 %v13, 4
    %vm82 = vcmp.ne.s32.totalorder %v81, 0
    %v84 = vlaneseq
    %v85 = vshrl.u32 %v84, 7
    %v86 = vsub.s32 0, %v85
    %v87 = vrot.slane %v71, %v86
    %v89 = vsel %vm82, %v87, 1.0
    %v90 = vmul.f32 %v68, %v80
    %v91 = vmul.f32 %v69, %v89
    %v92 = vmul.f32 %v29, %v90
    %v93 = vmul.f32 %v92, %v91
    %94 = vst [vmem:[#allocation2] sm:$0xff] %v93
    // Predicated region
    $region6: #{run.1} parent=1 // pred_check
      _
    $region7: #{run.1} parent=1 // pred_check_branch
      %96 = sbr.rel (0) target = $region9
    $region8: #{run.1} parent=1 // pred_region
      %s98 = ssub.s32 128, 128
      %99 = vsyncadd [#allocation3], %s98
      %s101 = sshll.u32 [#allocation2], 4
      %s102 = int_to_ptr.vmem [resolvable:$true] %s101
      %104 = dma.vmem_to_hbm [thread:$0]  %s102, 128, %s1, [#allocation3]
    $region9: #{run.1} parent=1 // pred_fallthru
      _
    // Predicated region
    $region10: #{run.1} parent=1 // pred_check
      _
    $region11: #{run.1} parent=1 // pred_check_branch
      %106 = sbr.rel (0) target = $region13
    $region12: #{run.1} parent=1 // pred_region
      %107 = dma.done [#allocation3], 128
    $region13: #{run.1} parent=1 // pred_fallthru
      _
    %108 = vsyncpa [#allocation3], 1

</llo_original>
